<compile_context>
chip_gen: v5e
topology: v5e:2x2
jax: 0.10.0
libtpu: 0.0.40
codegen_flags: <defaults>
</compile_context>

<pallas_src>
import functools

import jax
import jax.numpy as jnp
import numpy as np
from jax.experimental import pallas as pl
from jax.experimental.pallas import tpu as pltpu

KSIZE = 7
STRIDE = 3
POOL_STRIDE = 2 * STRIDE  # input stride between consecutive pooled positions
BN_EPS = 1e-5


def _cdiv(a, b):
    return -(-a // b)


def _round_up(a, b):
    return _cdiv(a, b) * b


def _pick_tiling(nl):
    """Tile the collapsed (N*L_pool) lane axis.

    Returns (tile_lanes, num_tiles). Tiles are multiples of 128, capped at 4096 lanes,
    with >=2 (even when cheap) grid steps so both v7x TensorCores get work, and at most
    ~one tile of padding waste.
    """
    n128 = _cdiv(nl, 128)
    if n128 <= 1:
        return 128, 1
    tiles = max(2, _cdiv(n128, 32))           # cap tile at 32*128 = 4096 lanes
    if tiles > 2 and tiles % 2 == 1:
        tiles += 1                            # even split across the 2 v7x TCs
    chunks_per_tile = _cdiv(n128, tiles)
    tiles = _cdiv(n128, chunks_per_tile)      # drop empty trailing tiles
    return chunks_per_tile * 128, tiles


def _conv_bn_relu_pool_kernel(p_ref, w_ref, scale_ref, shift_ref, o_ref, *, c_half):
    """One lane-tile grid step.

    p_ref:     (K2_pad, TM)      bf16  im2col patches; rows [0,K)=even conv positions,
                                       [K,2K)=odd, rest zero pad. lanes = n*L_pool + p.
    w_ref:     (2*C_pad, K2_pad) bf16  block-diagonal weight [[W, 0], [0, W]] (resident)
    scale_ref: (2*C_pad, 1)      f32   BN scale (gamma/sqrt(var+eps)), duplicated halves
    shift_ref: (2*C_pad, 1)      f32   BN shift ((b-mean)*scale+beta), duplicated halves
    o_ref:     (C_pad, TM)       f32   pooled output tile (lane-dense)
    """
    # Single fused MXU dot: top C_pad rows = even conv positions, bottom = odd.
    z = jnp.dot(w_ref[...], p_ref[...], preferred_element_type=jnp.float32)
    z = z * scale_ref[...] + shift_ref[...]                # BN applied in f32 (VPU)
    y = jnp.maximum(z[:c_half], z[c_half:])                # MaxPool1d(2)
    o_ref[...] = jnp.maximum(y, 0.0).astype(o_ref.dtype)   # ReLU (commutes with max)


def conv_module_forward(x, params):
    """x: (N, C_in, L) float32 -> (N, C_out, L_pool) float32 (PyTorch NCL layout)."""
    N, C_in, L = x.shape
    w = params["conv_w"]            # (C_out, C_in, 7)
    b = params["conv_b"]            # (C_out,)
    gamma, beta = params["bn_gamma"], params["bn_beta"]
    mean, var = params["bn_mean"], params["bn_var"]
    C_out = w.shape[0]

    K = C_in * KSIZE
    K2 = 2 * K
    K2_pad = _round_up(K2, 16)                  # bf16 packs 16 sublanes / vreg
    C_pad = _round_up(C_out, 8)

    L_out = (L - KSIZE) // STRIDE + 1
    L_pool = L_out // 2
    NL = N * L_pool                             # batch folded into the lane axis
    TM, tiles = _pick_tiling(NL)
    NL_pad = TM * tiles

    # --- im2col via strided slices (no gather); bf16 BEFORE expansion ----------------
    xt = x.transpose(1, 0, 2).astype(jnp.bfloat16)          # (C_in, N, L)
    offsets = list(range(KSIZE)) + list(range(STRIDE, STRIDE + KSIZE))  # even taps, odd taps
    rows = []
    for off in offsets:
        stop = off + POOL_STRIDE * (L_pool - 1) + 1
        sl = xt[:, :, off:stop:POOL_STRIDE]                 # (C_in, N, L_pool) strided slice
        rows.append(sl.reshape(C_in, NL))
    patches = jnp.concatenate(rows, axis=0)                 # (2K, NL); row = t*C_in + c
    patches = jnp.pad(patches, ((0, K2_pad - K2), (0, NL_pad - NL)))

    # --- BN-folded per-channel scale/shift (kept in f32); block-diagonal bf16 weight --
    scale = gamma / jnp.sqrt(var + BN_EPS)                  # (C_out,)
    shift = (b - mean) * scale + beta                       # (C_out,)
    wf = w.transpose(0, 2, 1).reshape(C_out, K)             # columns ordered t*C_in + c
    wf = jnp.pad(wf, ((0, C_pad - C_out), (0, 0)))          # (C_pad, K)
    zcol = jnp.zeros((C_pad, K), wf.dtype)
    padc = jnp.zeros((C_pad, K2_pad - K2), wf.dtype)
    w2 = jnp.concatenate(
        [jnp.concatenate([wf, zcol, padc], axis=1),
         jnp.concatenate([zcol, wf, padc], axis=1)],
        axis=0,
    ).astype(jnp.bfloat16)                                  # (2*C_pad, K2_pad)
    scale_p = jnp.pad(scale, (0, C_pad - C_out))
    shift_p = jnp.pad(shift, (0, C_pad - C_out))
    scale2 = jnp.concatenate([scale_p, scale_p])[:, None].astype(jnp.float32)
    shift2 = jnp.concatenate([shift_p, shift_p])[:, None].astype(jnp.float32)

    # --- Pallas call: 1-D parallel grid over lane tiles (batch already folded in) -----
    out = pl.pallas_call(
        functools.partial(_conv_bn_relu_pool_kernel, c_half=C_pad),
        out_shape=jax.ShapeDtypeStruct((C_pad, NL_pad), jnp.float32),
        grid=(tiles,),
        in_specs=[
            pl.BlockSpec((K2_pad, TM), lambda l: (0, l)),
            pl.BlockSpec((2 * C_pad, K2_pad), lambda l: (0, 0)),  # resident weight
            pl.BlockSpec((2 * C_pad, 1), lambda l: (0, 0)),       # resident BN scale
            pl.BlockSpec((2 * C_pad, 1), lambda l: (0, 0)),       # resident BN shift
        ],
        out_specs=pl.BlockSpec((C_pad, TM), lambda l: (0, l)),
        compiler_params=pltpu.CompilerParams(dimension_semantics=("parallel",)),
    )(patches, w2, scale2, shift2)

    # Small output slab: strip padding and restore the (N, C_out, L_pool) NCL layout.
    return out[:C_out, :NL].reshape(C_out, N, L_pool).transpose(1, 0, 2)


def _reference_forward(x, params):
    """Pure-JAX f32 reference (mirrors PyTorch eval-mode forward)."""
    w, b = params["conv_w"], params["conv_b"]
    conv = jax.lax.conv_general_dilated(
        x, w, window_strides=(STRIDE,), padding="VALID",
        dimension_numbers=("NCH", "OIH", "NCH"),
    ) + b[None, :, None]
    bn = (conv - params["bn_mean"][None, :, None]) / jnp.sqrt(
        params["bn_var"][None, :, None] + BN_EPS
    ) * params["bn_gamma"][None, :, None] + params["bn_beta"][None, :, None]
    relu = jnp.maximum(bn, 0.0)
    L_out = relu.shape[-1]
    L_pool = L_out // 2
    pooled = relu[:, :, : 2 * L_pool].reshape(relu.shape[0], relu.shape[1], L_pool, 2)
    return pooled.max(axis=-1)   # dropout is identity in eval mode


if __name__ == "__main__":
    # Shapes consistent with Conv1d(C_in, C_out, 7, 3): L_out = 131 (odd -> exercises the
    # dropped trailing conv position), L_pool = 65 -> N*L_pool = 260 lanes (exercises lane
    # padding and the 2-tile parallel grid).
    N, C_in, C_out, L = 4, 4, 8, 398

    key = jax.random.PRNGKey(0)
    k_x, k_w, k_b, k_g, k_be, k_m, k_v = jax.random.split(key, 7)

    x = jax.random.normal(k_x, (N, C_in, L), dtype=jnp.float32)
    params = {
        "conv_w": 0.2 * jax.random.normal(k_w, (C_out, C_in, KSIZE), dtype=jnp.float32),
        "conv_b": 0.1 * jax.random.normal(k_b, (C_out,), dtype=jnp.float32),
        "bn_gamma": 1.0 + 0.1 * jax.random.normal(k_g, (C_out,), dtype=jnp.float32),
        "bn_beta": 0.1 * jax.random.normal(k_be, (C_out,), dtype=jnp.float32),
        "bn_mean": 0.1 * jax.random.normal(k_m, (C_out,), dtype=jnp.float32),
        "bn_var": jax.random.uniform(k_v, (C_out,), jnp.float32, 0.5, 1.5),
    }

    fwd = jax.jit(conv_module_forward)
    out = jax.block_until_ready(fwd(x, params))
    ref = jax.block_until_ready(_reference_forward(x, params))

    assert out.shape == ref.shape, (out.shape, ref.shape)
    # bf16 streamed operands (f32 MXU accumulation, f32 BN epilogue) -> loose tolerance.
    np.testing.assert_allclose(np.asarray(out), np.asarray(ref), rtol=5e-2, atol=5e-2)
    print("KERNEL_OK")
</pallas_src>

<mosaic_0001>
module attributes {stable_mosaic.version = 11 : i64} {
  func.func @_conv_bn_relu_pool_kernel(%arg0: i32, %arg1: memref<64x256xbf16, #tpu.memory_space<vmem>>, %arg2: memref<16x64xbf16, #tpu.memory_space<vmem>>, %arg3: memref<16x1xf32, #tpu.memory_space<vmem>>, %arg4: memref<16x1xf32, #tpu.memory_space<vmem>>, %arg5: memref<8x256xf32, #tpu.memory_space<vmem>>) attributes {dimension_semantics = [#tpu.dimension_semantics<parallel>], iteration_bounds = array<i64: 2>, scalar_prefetch = 0 : i64, scratch_operands = 0 : i64, tpu.core_type = #tpu.core_type<tc>, window_params = [{transform_indices = @transform_0, window_bounds = array<i64: 64, 256>}, {pipeline_mode = #tpu.pipeline_mode<synchronous>, transform_indices = @transform_1, window_bounds = array<i64: 16, 64>}, {pipeline_mode = #tpu.pipeline_mode<synchronous>, transform_indices = @transform_2, window_bounds = array<i64: 16, 1>}, {pipeline_mode = #tpu.pipeline_mode<synchronous>, transform_indices = @transform_3, window_bounds = array<i64: 16, 1>}, {transform_indices = @transform_4, window_bounds = array<i64: 8, 256>}]} {
    %c0 = arith.constant 0 : index
    %c0_0 = arith.constant 0 : index
    %0 = vector.load %arg2[%c0, %c0_0] : memref<16x64xbf16, #tpu.memory_space<vmem>>, vector<16x64xbf16>
    %c0_1 = arith.constant 0 : index
    %c0_2 = arith.constant 0 : index
    %1 = vector.load %arg1[%c0_1, %c0_2] : memref<64x256xbf16, #tpu.memory_space<vmem>>, vector<64x256xbf16>
    %cst = arith.constant dense<0.000000e+00> : vector<16x256xf32>
    %2 = tpu.matmul %0, %1, %cst {dimension_numbers = #tpu.dot_dimension_numbers<[1], [0], [0], [1], [0, 0, 1, 1], [], []>} : vector<16x64xbf16>, vector<64x256xbf16>, vector<16x256xf32> -> vector<16x256xf32>
    %c0_3 = arith.constant 0 : index
    %c0_4 = arith.constant 0 : index
    %3 = vector.load %arg3[%c0_3, %c0_4] : memref<16x1xf32, #tpu.memory_space<vmem>>, vector<16x1xf32>
    %4 = vector.broadcast %3 : vector<16x1xf32> to vector<16x256xf32>
    %5 = arith.mulf %2, %4 : vector<16x256xf32>
    %c0_5 = arith.constant 0 : index
    %c0_6 = arith.constant 0 : index
    %6 = vector.load %arg4[%c0_5, %c0_6] : memref<16x1xf32, #tpu.memory_space<vmem>>, vector<16x1xf32>
    %7 = vector.broadcast %6 : vector<16x1xf32> to vector<16x256xf32>
    %8 = arith.addf %5, %7 : vector<16x256xf32>
    %9 = vector.extract_strided_slice %8 {offsets = [0, 0], sizes = [8, 256], strides = [1, 1]} : vector<16x256xf32> to vector<8x256xf32>
    %10 = vector.extract_strided_slice %8 {offsets = [8, 0], sizes = [8, 256], strides = [1, 1]} : vector<16x256xf32> to vector<8x256xf32>
    %11 = arith.maximumf %9, %10 : vector<8x256xf32>
    %cst_7 = arith.constant 0.000000e+00 : f32
    %12 = vector.broadcast %cst_7 : f32 to vector<8x256xf32>
    %13 = arith.maximumf %11, %12 : vector<8x256xf32>
    %c0_8 = arith.constant 0 : index
    %c0_9 = arith.constant 0 : index
    %14 = vector.load %arg5[%c0_8, %c0_9] : memref<8x256xf32, #tpu.memory_space<vmem>>, vector<8x256xf32>
    tpu.vector_store %arg5[%c0_8, %c0_9], %13 {strides = array<i32>} : memref<8x256xf32, #tpu.memory_space<vmem>>, vector<8x256xf32>,
    return
  }
  func.func @transform_0(%arg0: i32) -> (i32, i32) {
    %c0_i32 = arith.constant 0 : i32
    %c0_i32_0 = arith.constant 0 : i32
    return %c0_i32, %arg0 : i32, i32
  }
  func.func @transform_1(%arg0: i32) -> (i32, i32) {
    %c0_i32 = arith.constant 0 : i32
    %c0_i32_0 = arith.constant 0 : i32
    %c0_i32_1 = arith.constant 0 : i32
    return %c0_i32, %c0_i32_0 : i32, i32
  }
  func.func @transform_2(%arg0: i32) -> (i32, i32) {
    %c0_i32 = arith.constant 0 : i32
    %c0_i32_0 = arith.constant 0 : i32
    %c0_i32_1 = arith.constant 0 : i32
    return %c0_i32, %c0_i32_0 : i32, i32
  }
  func.func @transform_3(%arg0: i32) -> (i32, i32) {
    %c0_i32 = arith.constant 0 : i32
    %c0_i32_0 = arith.constant 0 : i32
    %c0_i32_1 = arith.constant 0 : i32
    return %c0_i32, %c0_i32_0 : i32, i32
  }
  func.func @transform_4(%arg0: i32) -> (i32, i32) {
    %c0_i32 = arith.constant 0 : i32
    %c0_i32_0 = arith.constant 0 : i32
    return %c0_i32, %arg0 : i32, i32
  }
}

</mosaic_0001>

<llo_original>
// kernel: conv_module_forward.1
$region0: #{conv_module_forward.1}
  #allocation0 [shape = 'u32[]', space=smem, size = 0x4, offset = 0x4, fixed_abs, tag = 'smem constant byte address 0x4 - core index']
  #allocation1 [shape = 'u32[72,128]{1,0:T(1,128)}', space=vmem, size = 0x9000, scoped, tag = 'internal scratch']
  %s0 = inlined_call_operand.vmem [shape: bf16[64,512], index: 0, kind: input, shape index: {}]
  %s1 = inlined_call_operand.vmem [shape: bf16[16,64], index: 1, kind: input, shape index: {}]
  %s2 = inlined_call_operand.vmem [shape: f32[16,1], index: 2, kind: input, shape index: {}]
  %s3 = inlined_call_operand.vmem [shape: f32[16,1], index: 3, kind: input, shape index: {}]
  %s4 = inlined_call_operand.vmem [shape: f32[8,512], index: 4, kind: output, shape index: {}]
  %s5 = sld [smem:[#allocation0]]
  $region87: #{conv_module_forward.1} parent=0
    _
  %s7 = ssub.s32 1, %s5
  %s8 = scalar_select 0, %s7, %s5
  $region1: #{conv_module_forward.1} parent=0
    #allocation2 [shape = 'u8[65536]{0}', space=vmem, size = 0x10000, scoped, tag = 'input window, operand 0']
    loop: start=0, step=1, limit=4
    $region2: #{conv_module_forward.1} parent=1 // loop_pre_header
      _
    $region3: #{conv_module_forward.1} parent=1 // loop_header
      %s10 = sphi 0, %s14
      %p11 = scmp.ge.s32.totalorder %s10, 4
      %s20 = sphi 0, %s22
      %s23 = sphi 0, %s20
      %s24 = sphi 0, %s23
      %s40 = sphi 0, %s24
      %s44 = sphi 0, %s44
      %s46 = sphi 0, %s44
      %s47 = sphi 0, %s46
      %s61 = sphi 0, %s47
      %s65 = sphi 0, %s65
      %s67 = sphi 0, %s65
      %s68 = sphi 0, %s67
      %s82 = sphi 0, %s68
      %s86 = sphi 0, %s86
      %s88 = sphi 0, %s86
      %s89 = sphi 0, %s88
      %s103 = sphi 0, %s89
      %s109 = sphi 0, %s111
      %s112 = sphi 0, %s109
      %s113 = sphi 0, %s112
      %s129 = sphi 0, %s113
    $region4: #{conv_module_forward.1} parent=1 // loop_header_branch
      %13 = sbr.rel (%p11) target = $region8
    $region5: #{conv_module_forward.1} parent=1 // loop_body
      %s15 = ssub.s32 %s10, 1
      %s16 = ssub.s32 %s10, 2
      %s17 = sadd.s32 %s10, 1
      %s18 = ssub.s32 %s10, %s17
      %p19 = scmp.eq.s32.totalorder %s18, 0
      %s21 = sadd.s32 %s20, 1
      %s22 = scalar_select %p19, %s20, %s21
      %p25 = pneg %p19
      %p26 = scmp.eq.s32.totalorder %s10, 1
      %p27 = por %p25, %p26
      %p28 = scmp.ne.s32.totalorder %s20, %s23
      %p29 = scmp.eq.s32.totalorder %s10, 0
      %p30 = por %p28, %p29
      %p31 = scmp.ne.s32.totalorder %s20, %s23
      %p32 = scmp.eq.s32.totalorder %s15, 1
      %p33 = por %p31, %p32
      %p34 = scmp.ne.s32.totalorder %s23, %s24
      %p35 = scmp.eq.s32.totalorder %s15, 0
      %p36 = por %p34, %p35
      %p37 = scmp.ne.s32.totalorder %s23, %s24
      %p38 = scmp.eq.s32.totalorder %s16, 1
      %p39 = por %p37, %p38
      %p41 = scmp.ne.s32.totalorder %s24, %s40
      %p42 = scmp.eq.s32.totalorder %s16, 0
      %p43 = por %p41, %p42
      %s45 = sadd.s32 %s44, 1
      %p48 = scmp.eq.s32.totalorder %s10, 1
      %p49 = scmp.ne.s32.totalorder %s44, %s46
      %p50 = scmp.eq.s32.totalorder %s10, 0
      %p51 = por %p49, %p50
      %p52 = scmp.ne.s32.totalorder %s44, %s46
      %p53 = scmp.eq.s32.totalorder %s15, 1
      %p54 = por %p52, %p53
      %p55 = scmp.ne.s32.totalorder %s46, %s47
      %p56 = scmp.eq.s32.totalorder %s15, 0
      %p57 = por %p55, %p56
      %p58 = scmp.ne.s32.totalorder %s46, %s47
      %p59 = scmp.eq.s32.totalorder %s16, 1
      %p60 = por %p58, %p59
      %p62 = scmp.ne.s32.totalorder %s47, %s61
      %p63 = scmp.eq.s32.totalorder %s16, 0
      %p64 = por %p62, %p63
      %s66 = sadd.s32 %s65, 1
      %p69 = scmp.eq.s32.totalorder %s10, 1
      %p70 = scmp.ne.s32.totalorder %s65, %s67
      %p71 = scmp.eq.s32.totalorder %s10, 0
      %p72 = por %p70, %p71
      %p73 = scmp.ne.s32.totalorder %s65, %s67
      %p74 = scmp.eq.s32.totalorder %s15, 1
      %p75 = por %p73, %p74
      %p76 = scmp.ne.s32.totalorder %s67, %s68
      %p77 = scmp.eq.s32.totalorder %s15, 0
      %p78 = por %p76, %p77
      %p79 = scmp.ne.s32.totalorder %s67, %s68
      %p80 = scmp.eq.s32.totalorder %s16, 1
      %p81 = por %p79, %p80
      %p83 = scmp.ne.s32.totalorder %s68, %s82
      %p84 = scmp.eq.s32.totalorder %s16, 0
      %p85 = por %p83, %p84
      %s87 = sadd.s32 %s86, 1
      %p90 = scmp.eq.s32.totalorder %s10, 1
      %p91 = scmp.ne.s32.totalorder %s86, %s88
      %p92 = scmp.eq.s32.totalorder %s10, 0
      %p93 = por %p91, %p92
      %p94 = scmp.ne.s32.totalorder %s86, %s88
      %p95 = scmp.eq.s32.totalorder %s15, 1
      %p96 = por %p94, %p95
      %p97 = scmp.ne.s32.totalorder %s88, %s89
      %p98 = scmp.eq.s32.totalorder %s15, 0
      %p99 = por %p97, %p98
      %p100 = scmp.ne.s32.totalorder %s88, %s89
      %p101 = scmp.eq.s32.totalorder %s16, 1
      %p102 = por %p100, %p101
      %p104 = scmp.ne.s32.totalorder %s89, %s103
      %p105 = scmp.eq.s32.totalorder %s16, 0
      %p106 = por %p104, %p105
      %s107 = ssub.s32 %s10, %s17
      %p108 = scmp.eq.s32.totalorder %s107, 0
      %s110 = sadd.s32 %s109, 1
      %s111 = scalar_select %p108, %s109, %s110
      %p114 = pneg %p108
      %p115 = scmp.eq.s32.totalorder %s10, 1
      %p116 = por %p114, %p115
      %p117 = scmp.ne.s32.totalorder %s109, %s112
      %p118 = scmp.eq.s32.totalorder %s10, 0
      %p119 = por %p117, %p118
      %p120 = scmp.ne.s32.totalorder %s109, %s112
      %p121 = scmp.eq.s32.totalorder %s15, 1
      %p122 = por %p120, %p121
      %p123 = scmp.ne.s32.totalorder %s112, %s113
      %p124 = scmp.eq.s32.totalorder %s15, 0
      %p125 = por %p123, %p124
      %p126 = scmp.ne.s32.totalorder %s112, %s113
      %p127 = scmp.eq.s32.totalorder %s16, 1
      %p128 = por %p126, %p127
      %p130 = scmp.ne.s32.totalorder %s113, %s129
      %p131 = scmp.eq.s32.totalorder %s16, 0
      %p132 = por %p130, %p131
      %p133 = scmp.le.s32.totalorder 1, %s10
      %p134 = scmp.lt.s32.totalorder %s10, 3
      %p135 = pnand %p133, %p134
      %p136 = pneg %p135
      // Predicated region
      $region9: #{conv_module_forward.1} parent=5 // pred_check
        _
      $region10: #{conv_module_forward.1} parent=5 // pred_check_branch
        %138 = sbr.rel (%p135) target = $region12
      $region11: #{conv_module_forward.1} parent=5 // pred_region
        %s139 = ssub.s32 %s10, 1
        // Predicated region
        $region13: #{conv_module_forward.1} parent=11 // pred_check
          %p140 = pneg %p57
        $region14: #{conv_module_forward.1} parent=11 // pred_check_branch
          %142 = sbr.rel (%p140) target = $region16
        $region15: #{conv_module_forward.1} parent=11 // pred_region
          _
        $region16: #{conv_module_forward.1} parent=11 // pred_fallthru
          _
        // Predicated region
        $region17: #{conv_module_forward.1} parent=11 // pred_check
          %p143 = pneg %p78
        $region18: #{conv_module_forward.1} parent=11 // pred_check_branch
          %145 = sbr.rel (%p143) target = $region20
        $region19: #{conv_module_forward.1} parent=11 // pred_region
          _
        $region20: #{conv_module_forward.1} parent=11 // pred_fallthru
          _
        // Predicated region
        $region21: #{conv_module_forward.1} parent=11 // pred_check
          %p146 = pneg %p99
        $region22: #{conv_module_forward.1} parent=11 // pred_check_branch
          %148 = sbr.rel (%p146) target = $region24
        $region23: #{conv_module_forward.1} parent=11 // pred_region
          _
        $region24: #{conv_module_forward.1} parent=11 // pred_fallthru
          _
      $region12: #{conv_module_forward.1} parent=5 // pred_fallthru
        _
      %p149 = scmp.lt.s32.totalorder %s10, 2
      // Predicated region
      $region25: #{conv_module_forward.1} parent=5 // pred_check
        %p150 = pneg %p149
      $region26: #{conv_module_forward.1} parent=5 // pred_check_branch
        %152 = sbr.rel (%p150) target = $region28
      $region27: #{conv_module_forward.1} parent=5 // pred_region
        // Predicated region
        $region29: #{conv_module_forward.1} parent=27 // pred_check
          %p153 = pneg %p30
        $region30: #{conv_module_forward.1} parent=27 // pred_check_branch
          %155 = sbr.rel (%p153) target = $region32
        $region31: #{conv_module_forward.1} parent=27 // pred_region
          %s156 = sand.u32 %s20, 1
          %s157 = sand.u32 %s20, 1
          %s158 = smul.addr %s157, 64
          %s159 = scalar_lea.vmem [#allocation2], %s158
          %s160 = smul.u32 2, %s10
          %s161 = smul.addr %s160, 4
          %s162 = scalar_lea.vmem %s0, %s161
          // Predicated region
          $region33: #{conv_module_forward.1} parent=31 // pred_check
            _
          $region34: #{conv_module_forward.1} parent=31 // pred_check_branch
            %164 = sbr.rel (0) target = $region36
          $region35: #{conv_module_forward.1} parent=31 // pred_region
            // Predicated region
            $region37: #{conv_module_forward.1} parent=35 // pred_check
              _
            $region38: #{conv_module_forward.1} parent=35 // pred_check_branch
              %166 = sbr.rel (0) target = $region40
            $region39: #{conv_module_forward.1} parent=35 // pred_region
              // Predicated region
              $region52: #{conv_module_forward.1} parent=39 // pred_check
                _
              $region53: #{conv_module_forward.1} parent=39 // pred_check_branch
                %196 = sbr.rel (0) target = $region55
              $region54: #{conv_module_forward.1} parent=39 // pred_region
                loop: start=0, step=1, limit=1
                $region56: #{conv_module_forward.1} parent=54 // loop_pre_header
                  _
                $region57: #{conv_module_forward.1} parent=54 // loop_header
                  %s198 = sphi 0, %s202
                  %p199 = scmp.ge.s32.totalorder %s198, 1
                  %s203 = sphi %s162, %s162
                  %s204 = sphi %s159, %s159
                $region58: #{conv_module_forward.1} parent=54 // loop_header_branch
                  %201 = sbr.rel (%p199) target = $region62
                $region59: #{conv_module_forward.1} parent=54 // loop_body
                  %v205 = vld [vmem:[%s203] sm:$0xff]
                  %206 = vst [vmem:[%s204] sm:$0xff] %v205
                  %v207 = vld [vmem:[%s203 + $0x10] sm:$0xff]
                  %208 = vst [vmem:[%s204 + $0x8] sm:$0xff] %v207
                  %v209 = vld [vmem:[%s203 + $0x20] sm:$0xff]
                  %210 = vst [vmem:[%s204 + $0x10] sm:$0xff] %v209
                  %v211 = vld [vmem:[%s203 + $0x30] sm:$0xff]
                  %212 = vst [vmem:[%s204 + $0x18] sm:$0xff] %v211
                  %v213 = vld [vmem:[%s203 + $0x40] sm:$0xff]
                  %214 = vst [vmem:[%s204 + $0x20] sm:$0xff] %v213
                  %v215 = vld [vmem:[%s203 + $0x50] sm:$0xff]
                  %216 = vst [vmem:[%s204 + $0x28] sm:$0xff] %v215
                  %v217 = vld [vmem:[%s203 + $0x60] sm:$0xff]
                  %218 = vst [vmem:[%s204 + $0x30] sm:$0xff] %v217
                  %v219 = vld [vmem:[%s203 + $0x70] sm:$0xff]
                  %220 = vst [vmem:[%s204 + $0x38] sm:$0xff] %v219
                $region60: #{conv_module_forward.1} parent=54 // loop_footer
                  %s202 = sadd.s32 1, %s198
                $region61: #{conv_module_forward.1} parent=54 // loop_footer_branch
                  %197 = sbr.rel target = $region57
                $region62: #{conv_module_forward.1} parent=54 // loop_exit
                  _
              $region55: #{conv_module_forward.1} parent=39 // pred_fallthru
                _
              // Predicated region
              $region63: #{conv_module_forward.1} parent=39 // pred_check
                _
              $region64: #{conv_module_forward.1} parent=39 // pred_check_branch
                %222 = sbr.rel target = $region66
              $region65: #{conv_module_forward.1} parent=39 // pred_region
                _
              $region66: #{conv_module_forward.1} parent=39 // pred_fallthru
                _
            $region40: #{conv_module_forward.1} parent=35 // pred_fallthru
              _
            // Predicated region
            $region41: #{conv_module_forward.1} parent=35 // pred_check
              _
            $region42: #{conv_module_forward.1} parent=35 // pred_check_branch
              %168 = sbr.rel target = $region44
            $region43: #{conv_module_forward.1} parent=35 // pred_region
              %s170 = ssub.s32 256, 1
              loop: start=0, step=1, limit=1
              $region45: #{conv_module_forward.1} parent=43 // loop_pre_header
                _
              $region46: #{conv_module_forward.1} parent=43 // loop_header
                %s172 = sphi 0, %s176
                %p173 = scmp.ge.s32.totalorder %s172, 1
                %s177 = sphi %s162, %s162
                %s178 = sphi %s159, %s159
              $region47: #{conv_module_forward.1} parent=43 // loop_header_branch
                %175 = sbr.rel (%p173) target = $region51
              $region48: #{conv_module_forward.1} parent=43 // loop_body
                %v179 = vld [vmem:[%s177] sm:%s170]
                %180 = vst [vmem:[%s178] sm:%s170] %v179
                %v181 = vld [vmem:[%s177 + $0x10] sm:%s170]
                %182 = vst [vmem:[%s178 + $0x8] sm:%s170] %v181
                %v183 = vld [vmem:[%s177 + $0x20] sm:%s170]
                %184 = vst [vmem:[%s178 + $0x10] sm:%s170] %v183
                %v185 = vld [vmem:[%s177 + $0x30] sm:%s170]
                %186 = vst [vmem:[%s178 + $0x18] sm:%s170] %v185
                %v187 = vld [vmem:[%s177 + $0x40] sm:%s170]
                %188 = vst [vmem:[%s178 + $0x20] sm:%s170] %v187
                %v189 = vld [vmem:[%s177 + $0x50] sm:%s170]
                %190 = vst [vmem:[%s178 + $0x28] sm:%s170] %v189
                %v191 = vld [vmem:[%s177 + $0x60] sm:%s170]
                %192 = vst [vmem:[%s178 + $0x30] sm:%s170] %v191
                %v193 = vld [vmem:[%s177 + $0x70] sm:%s170]
                %194 = vst [vmem:[%s178 + $0x38] sm:%s170] %v193
              $region49: #{conv_module_forward.1} parent=43 // loop_footer
                %s176 = sadd.s32 1, %s172
              $region50: #{conv_module_forward.1} parent=43 // loop_footer_branch
                %171 = sbr.rel target = $region46
              $region51: #{conv_module_forward.1} parent=43 // loop_exit
                _
            $region44: #{conv_module_forward.1} parent=35 // pred_fallthru
              _
          $region36: #{conv_module_forward.1} parent=31 // pred_fallthru
            _
          %223 = vnop
        $region32: #{conv_module_forward.1} parent=27 // pred_fallthru
          _
      $region28: #{conv_module_forward.1} parent=5 // pred_fallthru
        _
      %p224 = scmp.le.s32.totalorder 1, %s10
      %p225 = scmp.lt.s32.totalorder %s10, 3
      %p226 = pnand %p224, %p225
      %p227 = pneg %p226
      // Predicated region
      $region67: #{conv_module_forward.1} parent=5 // pred_check
        _
      $region68: #{conv_module_forward.1} parent=5 // pred_check_branch
        %229 = sbr.rel (%p226) target = $region70
      $region69: #{conv_module_forward.1} parent=5 // pred_region
        %s230 = ssub.s32 %s10, 1
        %s231 = sand.u32 %s23, 1
        %s232 = sand.u32 %s23, 1
        %s233 = smul.addr %s232, 64
        %s234 = scalar_lea.vmem [#allocation2], %s233
        // Predicated region
        $region71: #{conv_module_forward.1} parent=69 // pred_check
          %p235 = pneg %p36
        $region72: #{conv_module_forward.1} parent=69 // pred_check_branch
          %237 = sbr.rel (%p235) target = $region74
        $region73: #{conv_module_forward.1} parent=69 // pred_region
          _
        $region74: #{conv_module_forward.1} parent=69 // pred_fallthru
          _
        %s238 = sand.u32 %s23, 1
        %s239 = sand.u32 %s23, 1
        %s240 = smul.addr %s239, 64
        %s241 = scalar_lea.vmem [#allocation2], %s240
        %p242 = pneg %p36
        %p243 = pneg %p33
        %p244 = pneg %p57
        %p245 = pneg %p54
        %p246 = pneg %p78
        %p247 = pneg %p75
        %p248 = pneg %p99
        %p249 = pneg %p96
        %p250 = pneg %p125
        %p251 = pneg %p122
        %s252 = smul.u32 2, %s15
        %p253 = scmp.lt.s32.totalorder %s252, 3
        %s254 = scalar_select %p253, %s252, 3
        %s255 = smul.addr %s254, 8
        %s256 = scalar_lea.vmem %s4, %s255
        %s257 = smul.u32 2, %s15
        %s258 = smul.u32 2, %s15
        %p259 = scmp.lt.s32.totalorder %s258, 3
        %s260 = scalar_select %p259, %s258, 3
        %s261 = smul.addr %s260, 8
        %s262 = scalar_lea.vmem %s4, %s261
        %s263 = smul.u32 2, %s15
        %v265 = vld [vmem:[%s1] sm:$0xf]
        %v266 = vld [vmem:[%s1 + $0x4] sm:$0xf]
        %v267 = vld [vmem:[%s234] sm:$0xff]
        %v268 = vld [vmem:[%s234 + $0x8] sm:$0xff]
        %v269 = vld [vmem:[%s234 + $0x10] sm:$0xff]
        %v270 = vld [vmem:[%s234 + $0x18] sm:$0xff]
        %v271 = vld [vmem:[%s234 + $0x20] sm:$0xff]
        %v272 = vld [vmem:[%s234 + $0x28] sm:$0xff]
        %v273 = vld [vmem:[%s234 + $0x30] sm:$0xff]
        %v274 = vld [vmem:[%s234 + $0x38] sm:$0xff]
        %v277 = vunpack.c.l.b16 %v265
        %v278 = vunpack.c.l.b16 %v266
        %v279 = vpack.c.b16 %v278, %v277
        %v288 = vunpack.c.l.b16 %v267
        %v289 = vunpack.c.h.b16 %v267
        %v290 = vunpack.c.l.b16 %v268
        %v291 = vunpack.c.h.b16 %v268
        %v292 = vunpack.c.l.b16 %v269
        %v293 = vunpack.c.h.b16 %v269
        %v294 = vunpack.c.l.b16 %v270
        %v295 = vunpack.c.h.b16 %v270
        %v296 = vunpack.c.l.b16 %v271
        %v297 = vunpack.c.h.b16 %v271
        %v298 = vunpack.c.l.b16 %v272
        %v299 = vunpack.c.h.b16 %v272
        %v300 = vunpack.c.l.b16 %v273
        %v301 = vunpack.c.h.b16 %v273
        %v302 = vunpack.c.l.b16 %v274
        %v303 = vunpack.c.h.b16 %v274
        %v304 = vpack.c.b16 %v290, %v288
        %v305 = vpack.c.b16 %v291, %v289
        %v306 = vpack.c.b16 %v294, %v292
        %v307 = vpack.c.b16 %v295, %v293
        %v308 = vpack.c.b16 %v298, %v296
        %v309 = vpack.c.b16 %v299, %v297
        %v310 = vpack.c.b16 %v302, %v300
        %v311 = vpack.c.b16 %v303, %v301
        %vm320 = vcmask 523264
        %v322 = vsel %vm320, %v279, 0
        %324 = vmatpush.bf16.msra.mxu0 0
        %325 = vmatpush.bf16.msra.mxu0 0
        %326 = vmatpush.bf16.msra.mxu0 0
        %327 = vmatpush.bf16.msra.mxu0 0
        %328 = vmatpush.bf16.msra.mxu0 %v310
        %329 = vmatpush.bf16.msra.mxu0 %v308
        %330 = vmatpush.bf16.msra.mxu0 %v306
        %331 = vmatpush.bf16.msra.mxu0 %v304
        %332 = vmatmul.bf16.gmra.mxu0 %v322
        %v333 = vpop.f32.mrf.mxu0
        %v334 = vadd.f32 0.0, %v333
        %v335 = vpop.f32.mrf.mxu0
        %v336 = vadd.f32 0.0, %v335
        %337 = vdwg.mxu0
        %338 = vmatpush.bf16.msra.mxu0 0
        %339 = vmatpush.bf16.msra.mxu0 0
        %340 = vmatpush.bf16.msra.mxu0 0
        %341 = vmatpush.bf16.msra.mxu0 0
        %342 = vmatpush.bf16.msra.mxu0 %v311
        %343 = vmatpush.bf16.msra.mxu0 %v309
        %344 = vmatpush.bf16.msra.mxu0 %v307
        %345 = vmatpush.bf16.msra.mxu0 %v305
        %346 = vmatmul.bf16.gmra.mxu0 %v322
        %v347 = vpop.f32.mrf.mxu0
        %v348 = vadd.f32 0.0, %v347
        %v349 = vpop.f32.mrf.mxu0
        %v350 = vadd.f32 0.0, %v349
        %351 = vdwg.mxu0
        %v352 = vld [vmem:[%s2] sm:$0xff]
        %v353 = vld [vmem:[%s2 + $0x8] sm:$0xff]
        %355 = vset.pattern.permute.xlu0 0
        %356 = vperm.xlu0 %355, %v352
        %v357 = vpop.permute.xlu0 %356
        %360 = vset.pattern.permute.xlu0 0
        %361 = vperm.xlu0 %360, %v353
        %v362 = vpop.permute.xlu0 %361
        %v364 = vmul.f32 %v334, %v357
        %v365 = vmul.f32 %v348, %v357
        %v366 = vmul.f32 %v336, %v362
        %v367 = vmul.f32 %v350, %v362
        %v368 = vld [vmem:[%s3] sm:$0xff]
        %v369 = vld [vmem:[%s3 + $0x8] sm:$0xff]
        %371 = vset.pattern.permute.xlu0 0
        %372 = vperm.xlu0 %371, %v368
        %v373 = vpop.permute.xlu0 %372
        %376 = vset.pattern.permute.xlu0 0
        %377 = vperm.xlu0 %376, %v369
        %v378 = vpop.permute.xlu0 %377
        %v380 = vadd.f32 %v364, %v373
        %v381 = vadd.f32 %v365, %v373
        %v382 = vadd.f32 %v366, %v378
        %v383 = vadd.f32 %v367, %v378
        %v384 = vmax.f32 %v380, %v382
        %v385 = vmax.f32 %v381, %v383
        %v386 = vmax.f32 %v384, 0.0
        %v387 = vmax.f32 %v385, 0.0
        %388 = vst [vmem:[%s262] sm:$0xff] %v386
        %389 = vst [vmem:[%s262 + $0x8] sm:$0xff] %v387
        %s390 = smul.u32 2, %s15
        %p391 = scmp.lt.s32.totalorder %s390, 3
        %s392 = scalar_select %p391, %s390, 3
        %s393 = smul.addr %s392, 8
        %s394 = scalar_lea.vmem %s4, %s393
        // Predicated region
        $region75: #{conv_module_forward.1} parent=69 // pred_check
          %p395 = pneg %p122
        $region76: #{conv_module_forward.1} parent=69 // pred_check_branch
          %397 = sbr.rel (%p395) target = $region78
        $region77: #{conv_module_forward.1} parent=69 // pred_region
          %s398 = smul.u32 2, %s15
        $region78: #{conv_module_forward.1} parent=69 // pred_fallthru
          _
      $region70: #{conv_module_forward.1} parent=5 // pred_fallthru
        _
      %p399 = scmp.le.s32.totalorder 2, %s10
      // Predicated region
      $region79: #{conv_module_forward.1} parent=5 // pred_check
        %p400 = pneg %p399
      $region80: #{conv_module_forward.1} parent=5 // pred_check_branch
        %402 = sbr.rel (%p400) target = $region82
      $region81: #{conv_module_forward.1} parent=5 // pred_region
        %s403 = ssub.s32 %s10, 2
        // Predicated region
        $region83: #{conv_module_forward.1} parent=81 // pred_check
          %p404 = pneg %p128
        $region84: #{conv_module_forward.1} parent=81 // pred_check_branch
          %406 = sbr.rel (%p404) target = $region86
        $region85: #{conv_module_forward.1} parent=81 // pred_region
          %s407 = smul.u32 2, %s16
          %p408 = scmp.lt.s32.totalorder %s407, 3
          %s409 = scalar_select %p408, %s407, 3
          %s410 = smul.addr %s409, 8
          %s411 = scalar_lea.vmem %s4, %s410
        $region86: #{conv_module_forward.1} parent=81 // pred_fallthru
          _
      $region82: #{conv_module_forward.1} parent=5 // pred_fallthru
        _
    $region6: #{conv_module_forward.1} parent=1 // loop_footer
      %s14 = sadd.s32 1, %s10
    $region7: #{conv_module_forward.1} parent=1 // loop_footer_branch
      %9 = sbr.rel target = $region3
    $region8: #{conv_module_forward.1} parent=1 // loop_exit
      _

</llo_original>
